<compile_context>
chip_gen: v7x
topology: tpu7x:2x2x1
jax: 0.10.0
libtpu: 0.0.40
codegen_flags: <defaults>
</compile_context>

<pallas_src>
import jax
import jax.numpy as jnp
from jax.experimental import pallas as pl
from jax.experimental.pallas import tpu as pltpu


# ---------------------------------------------------------------------------
# Fused kernel: whole (Bt, C, HW) slab resident per grid step.
# ---------------------------------------------------------------------------
def _se_kernel(x_ref, w1t_ref, w2t_ref, o_ref):
    # x_ref:   (Bt, C, HW) slab, native dtype
    # w1t_ref: (C, hidden) f32, resident (constant index_map)
    # w2t_ref: (hidden, C) f32, resident
    x = x_ref[...]
    inv_hw = jnp.float32(1.0 / x.shape[-1])             # constant-folded

    # squeeze: global average pool over spatial dims (f32 accumulation only).
    y = jnp.sum(x, axis=-1, dtype=jnp.float32) * inv_hw                 # (Bt, C)

    # excite: Linear -> ReLU -> Linear -> Sigmoid (tiny, MXU/EUP).
    h = jnp.dot(y, w1t_ref[...], preferred_element_type=jnp.float32)    # (Bt, h)
    h = jnp.maximum(h, 0.0)
    s = jax.nn.sigmoid(
        jnp.dot(h, w2t_ref[...], preferred_element_type=jnp.float32))   # (Bt, C)

    # scale: big multiply stays in the input dtype.
    o_ref[...] = x * s.astype(x.dtype)[:, :, None]


# ---------------------------------------------------------------------------
# Fallback kernel: channel-tiled, two phases over the same tiles.
#   phase 0: per-channel means -> scratch; at last tile compute hidden acts.
#   phase 1: re-read tiles, apply sigmoid gate, write output.
# ---------------------------------------------------------------------------
def _make_tiled_kernel(nc):
    def kernel(x_ref, w1b_ref, w2b_ref, o_ref, acc_ref, h_ref):
        p = pl.program_id(1)                      # phase
        c = pl.program_id(2)                      # channel tile
        x = x_ref[...]                            # (Bt, Ct, HW)
        inv_hw = jnp.float32(1.0 / x.shape[-1])

        @pl.when(p == 0)
        def _():
            # Each (b, c) tile is visited exactly once in phase 0.
            acc_ref[c] = jnp.sum(x, axis=-1, dtype=jnp.float32) * inv_hw

        @pl.when((p == 0) & (c == nc - 1))
        def _():
            # All channel means available -> excite-MLP hidden activations.
            h = jnp.zeros(h_ref.shape, jnp.float32)
            for t in range(nc):                   # static unroll (tiny)
                h = h + jnp.dot(acc_ref[t], w1b_ref[t],
                                preferred_element_type=jnp.float32)
            h_ref[...] = jnp.maximum(h, 0.0)

        @pl.when(p == 1)
        def _():
            s = jax.nn.sigmoid(
                jnp.dot(h_ref[...], w2b_ref[c],
                        preferred_element_type=jnp.float32))     # (Bt, Ct)
            o_ref[...] = x * s.astype(x.dtype)[:, :, None]

    return kernel


# ---------------------------------------------------------------------------
# Tiling / budget helpers.
# ---------------------------------------------------------------------------
def _vmem_capacity_bytes():
    try:
        info = pltpu.get_tpu_info()
        for attr in ("vmem_capacity_bytes", "vmem_bytes", "vmem_size_bytes"):
            cap = getattr(info, attr, None)
            if cap:
                return int(cap)
    except Exception:
        pass
    return 64 * 1024 * 1024  # conservative: v7x per-TC VMEM


def _pick_batch_tile(B, bytes_per_image, budget_bytes):
    """Largest Bt fitting the budget, with >= 2 grid steps when B >= 2 and
    >= 4 steps while blocks stay >= 512 KiB (megacore + pipeline overlap)."""
    bt = max(1, min(B, budget_bytes // max(1, bytes_per_image)))
    if B >= 2:
        bt = min(bt, (B + 1) // 2)                # at least 2 grid steps
    min_block = 512 * 1024
    while ((B + bt - 1) // bt) < 4 and bt > 1 and \
            ((bt + 1) // 2) * bytes_per_image >= min_block:
        bt = (bt + 1) // 2
    return bt


def _pick_channel_tile(C, bytes_per_channel, budget_bytes):
    """Largest Ct dividing C (multiple of 8, or C itself) fitting the budget."""
    divs = [d for d in range(1, C + 1) if C % d == 0 and (d % 8 == 0 or d == C)]
    fitting = [d for d in divs if d * bytes_per_channel <= budget_bytes]
    return max(fitting) if fitting else min(divs)


# ---------------------------------------------------------------------------
# Wrapper.
# ---------------------------------------------------------------------------
def se_layer(x, w1, w2, *, block_budget_bytes=None):
    """SE forward. x: (B, C, H, W); w1: (hidden, C); w2: (C, hidden)."""
    B, C, H, W = x.shape
    hidden = w1.shape[0]
    HW = H * W
    itemsize = x.dtype.itemsize
    x2 = x.reshape(B, C, HW)

    # Pre-transpose + pre-cast weights once (resident f32 refs in the kernel).
    w1t = jnp.asarray(w1, jnp.float32).T          # (C, hidden)
    w2t = jnp.asarray(w2, jnp.float32).T          # (hidden, C)
    w_bytes = (w1t.size + w2t.size) * 4

    cap = _vmem_capacity_bytes()
    if block_budget_bytes is None:
        block_budget_bytes = min(16 << 20, cap // 8)  # ~8 MiB v7x, 16 MiB v5e/v6e
    block_budget_bytes = min(block_budget_bytes, cap // 6)

    bytes_per_image = C * HW * itemsize

    if bytes_per_image <= block_budget_bytes:
        # ---- fused path: one (Bt, C, HW) slab per grid step ----------------
        Bt = _pick_batch_tile(B, bytes_per_image, block_budget_bytes)
        grid = ((B + Bt - 1) // Bt,)              # partial last block is OK
        block_bytes = Bt * bytes_per_image
        vmem_limit = int(min(cap, max(32 << 20,
                                      4 * block_bytes + w_bytes + (8 << 20))))
        cost = pl.CostEstimate(
            flops=4 * B * C * hidden + 3 * B * C * HW,
            transcendentals=B * C,
            bytes_accessed=2 * B * C * HW * itemsize + w_bytes)

        out = pl.pallas_call(
            _se_kernel,
            out_shape=jax.ShapeDtypeStruct((B, C, HW), x.dtype),
            grid_spec=pltpu.PrefetchScalarGridSpec(
                num_scalar_prefetch=0,
                grid=grid,
                in_specs=[
                    pl.BlockSpec((Bt, C, HW), lambda b: (b, 0, 0)),
                    pl.BlockSpec((C, hidden), lambda b: (0, 0)),   # resident
                    pl.BlockSpec((hidden, C), lambda b: (0, 0)),   # resident
                ],
                out_specs=pl.BlockSpec((Bt, C, HW), lambda b: (b, 0, 0)),
            ),
            compiler_params=pltpu.CompilerParams(
                dimension_semantics=("parallel",),
                vmem_limit_bytes=vmem_limit,
            ),
            cost_estimate=cost,
        )(x2, w1t, w2t)
        return out.reshape(B, C, H, W)

    # ---- fallback: channel-tiled two-phase kernel (image > budget) ---------
    Ct = _pick_channel_tile(C, HW * itemsize, block_budget_bytes)
    nc = C // Ct
    Bt = 1
    block_bytes = Bt * Ct * HW * itemsize
    vmem_limit = int(min(cap, max(32 << 20,
                                  4 * block_bytes + w_bytes + (8 << 20))))

    # Pre-block weights by channel tile so the kernel only does leading-axis
    # indexing (no dynamic lane slices).
    w1b = w1t.reshape(nc, Ct, hidden)                        # (nc, Ct, hidden)
    w2b = w2t.reshape(hidden, nc, Ct).transpose(1, 0, 2)     # (nc, hidden, Ct)

    cost = pl.CostEstimate(
        flops=4 * B * C * hidden + 3 * B * C * HW,
        transcendentals=B * C,
        bytes_accessed=3 * B * C * HW * itemsize + w_bytes)

    out = pl.pallas_call(
        _make_tiled_kernel(nc),
        out_shape=jax.ShapeDtypeStruct((B, C, HW), x.dtype),
        grid_spec=pltpu.PrefetchScalarGridSpec(
            num_scalar_prefetch=0,
            grid=(B, 2, nc),                     # (batch, phase, channel tile)
            in_specs=[
                pl.BlockSpec((Bt, Ct, HW), lambda b, p, c: (b, c, 0)),
                pl.BlockSpec((nc, Ct, hidden), lambda b, p, c: (0, 0, 0)),
                pl.BlockSpec((nc, hidden, Ct), lambda b, p, c: (0, 0, 0)),
            ],
            # Phase 0 parks the output index on (b, 0, 0); phase 1 visits the
            # real blocks.  The shared (b, 0, 0) block is fully written at
            # phase-1 step c=0 before its writeback, so the final HBM contents
            # are always the gated values.
            out_specs=pl.BlockSpec((Bt, Ct, HW), lambda b, p, c: (b, c * p, 0)),
            scratch_shapes=[
                pltpu.VMEM((nc, Bt, Ct), jnp.float32),   # per-channel means
                pltpu.VMEM((Bt, hidden), jnp.float32),   # excite hidden acts
            ],
        ),
        compiler_params=pltpu.CompilerParams(
            dimension_semantics=("parallel", "arbitrary", "arbitrary"),
            vmem_limit_bytes=vmem_limit,
        ),
        cost_estimate=cost,
    )(x2, w1b, w2b)
    return out.reshape(B, C, H, W)


def se_layer_ref(x, w1, w2):
    """Pure-JAX reference matching the PyTorch forward."""
    y = jnp.mean(x.astype(jnp.float32), axis=(-1, -2))                # (B, C)
    y = jnp.maximum(y @ jnp.asarray(w1, jnp.float32).T, 0.0)          # (B, h)
    y = jax.nn.sigmoid(y @ jnp.asarray(w2, jnp.float32).T)            # (B, C)
    return (x.astype(jnp.float32) * y[:, :, None, None]).astype(x.dtype)


if __name__ == "__main__":
    # Module: SELayer(channel=64, reduction=16) -> hidden = 4.
    # Spatial 16x16 -> HW = 256 (multiple of 128, lane-dense stores).
    B, C, H, W = 4, 64, 16, 16
    reduction = 16
    hidden = C // reduction

    key = jax.random.PRNGKey(0)
    kx, k1, k2 = jax.random.split(key, 3)
    x = jax.random.normal(kx, (B, C, H, W), dtype=jnp.float32)
    # PyTorch nn.Linear weight layout: (out_features, in_features)
    w1 = jax.random.normal(k1, (hidden, C), dtype=jnp.float32) * 0.1
    w2 = jax.random.normal(k2, (C, hidden), dtype=jnp.float32) * 0.1

    ref = se_layer_ref(x, w1, w2)

    # Fused path (default budget; grid has >= 2 batch steps).
    out = jax.block_until_ready(se_layer(x, w1, w2))
    assert out.shape == (B, C, H, W)
    assert jnp.allclose(out, ref, atol=1e-5, rtol=1e-5), "fused path mismatch"

    # Force the channel-tiled two-phase fallback (image slab > tiny budget)
    # so the large-image path is validated too.
    out2 = jax.block_until_ready(
        se_layer(x, w1, w2, block_budget_bytes=32 * 1024))
    assert jnp.allclose(out2, ref, atol=1e-5, rtol=1e-5), "tiled path mismatch"

    print("KERNEL_OK")
</pallas_src>

<mosaic_0001>
module attributes {stable_mosaic.version = 11 : i64} {
  func.func @_se_kernel(%arg0: i32, %arg1: memref<2x64x256xf32, #tpu.memory_space<vmem>>, %arg2: memref<64x4xf32, #tpu.memory_space<vmem>>, %arg3: memref<4x64xf32, #tpu.memory_space<vmem>>, %arg4: memref<2x64x256xf32, #tpu.memory_space<vmem>>) attributes {dimension_semantics = [#tpu.dimension_semantics<parallel>], iteration_bounds = array<i64: 2>, scalar_prefetch = 0 : i64, scratch_operands = 0 : i64, tpu.core_type = #tpu.core_type<tc>, window_params = [{transform_indices = @transform_0, window_bounds = array<i64: 2, 64, 256>}, {pipeline_mode = #tpu.pipeline_mode<synchronous>, transform_indices = @transform_1, window_bounds = array<i64: 64, 4>}, {pipeline_mode = #tpu.pipeline_mode<synchronous>, transform_indices = @transform_2, window_bounds = array<i64: 4, 64>}, {transform_indices = @transform_3, window_bounds = array<i64: 2, 64, 256>}]} {
    %c0 = arith.constant 0 : index
    %c0_0 = arith.constant 0 : index
    %c0_1 = arith.constant 0 : index
    %0 = vector.load %arg1[%c0, %c0_0, %c0_1] : memref<2x64x256xf32, #tpu.memory_space<vmem>>, vector<2x64x256xf32>
    %cst = arith.constant dense<0.000000e+00> : vector<2x64xf32>
    %1 = vector.multi_reduction <add>, %0, %cst [2] : vector<2x64x256xf32> to vector<2x64xf32>
    %cst_2 = arith.constant 3.906250e-03 : f32
    %2 = vector.broadcast %cst_2 : f32 to vector<2x64xf32>
    %3 = arith.mulf %1, %2 : vector<2x64xf32>
    %c0_3 = arith.constant 0 : index
    %c0_4 = arith.constant 0 : index
    %4 = vector.load %arg2[%c0_3, %c0_4] : memref<64x4xf32, #tpu.memory_space<vmem>>, vector<64x4xf32>
    %cst_5 = arith.constant dense<0.000000e+00> : vector<2x4xf32>
    %5 = tpu.matmul %3, %4, %cst_5 {dimension_numbers = #tpu.dot_dimension_numbers<[1], [0], [0], [1], [0, 0, 1, 1], [], []>} : vector<2x64xf32>, vector<64x4xf32>, vector<2x4xf32> -> vector<2x4xf32>
    %cst_6 = arith.constant 0.000000e+00 : f32
    %6 = vector.broadcast %cst_6 : f32 to vector<2x4xf32>
    %7 = arith.maximumf %5, %6 : vector<2x4xf32>
    %c0_7 = arith.constant 0 : index
    %c0_8 = arith.constant 0 : index
    %8 = vector.load %arg3[%c0_7, %c0_8] : memref<4x64xf32, #tpu.memory_space<vmem>>, vector<4x64xf32>
    %cst_9 = arith.constant dense<0.000000e+00> : vector<2x64xf32>
    %9 = tpu.matmul %7, %8, %cst_9 {dimension_numbers = #tpu.dot_dimension_numbers<[1], [0], [0], [1], [0, 0, 1, 1], [], []>} : vector<2x4xf32>, vector<4x64xf32>, vector<2x64xf32> -> vector<2x64xf32>
    %10 = arith.negf %9 : vector<2x64xf32>
    %11 = math.exp %10 : vector<2x64xf32>
    %cst_10 = arith.constant 1.000000e+00 : f32
    %12 = vector.broadcast %cst_10 : f32 to vector<2x64xf32>
    %13 = arith.addf %12, %11 : vector<2x64xf32>
    %14 = arith.divf %12, %13 : vector<2x64xf32>
    %15 = vector.shape_cast %14 : vector<2x64xf32> to vector<2x64x1xf32>
    %16 = vector.broadcast %15 : vector<2x64x1xf32> to vector<2x64x256xf32>
    %17 = arith.mulf %0, %16 : vector<2x64x256xf32>
    %c0_11 = arith.constant 0 : index
    %c0_12 = arith.constant 0 : index
    %c0_13 = arith.constant 0 : index
    %18 = vector.load %arg4[%c0_11, %c0_12, %c0_13] : memref<2x64x256xf32, #tpu.memory_space<vmem>>, vector<2x64x256xf32>
    tpu.vector_store %arg4[%c0_11, %c0_12, %c0_13], %17 {strides = array<i32>} : memref<2x64x256xf32, #tpu.memory_space<vmem>>, vector<2x64x256xf32>,
    return
  }
  func.func @transform_0(%arg0: i32) -> (i32, i32, i32) {
    %c0_i32 = arith.constant 0 : i32
    %c0_i32_0 = arith.constant 0 : i32
    %c0_i32_1 = arith.constant 0 : i32
    return %arg0, %c0_i32, %c0_i32_0 : i32, i32, i32
  }
  func.func @transform_1(%arg0: i32) -> (i32, i32) {
    %c0_i32 = arith.constant 0 : i32
    %c0_i32_0 = arith.constant 0 : i32
    %c0_i32_1 = arith.constant 0 : i32
    return %c0_i32, %c0_i32_0 : i32, i32
  }
  func.func @transform_2(%arg0: i32) -> (i32, i32) {
    %c0_i32 = arith.constant 0 : i32
    %c0_i32_0 = arith.constant 0 : i32
    %c0_i32_1 = arith.constant 0 : i32
    return %c0_i32, %c0_i32_0 : i32, i32
  }
  func.func @transform_3(%arg0: i32) -> (i32, i32, i32) {
    %c0_i32 = arith.constant 0 : i32
    %c0_i32_0 = arith.constant 0 : i32
    %c0_i32_1 = arith.constant 0 : i32
    return %arg0, %c0_i32, %c0_i32_0 : i32, i32, i32
  }
}

</mosaic_0001>

<llo_original>
// kernel: tpu_custom_call.1
$region0: #{tpu_custom_call.1}
  #allocation0 [shape = 'u32[]', space=smem, size = 0x4, offset = 0x4, fixed_abs, tag = 'smem constant byte address 0x4 - core index']
  #allocation1 [shape = 'u32[144,128]{1,0:T(1,128)}', space=vmem, size = 0x12000, scoped, tag = 'internal scratch']
  %s0 = inlined_call_operand.hbm [shape: f32[4,64,256], index: 0, kind: input, shape index: {}]
  %s1 = inlined_call_operand.vmem [shape: f32[64,4], index: 1, kind: input, shape index: {}]
  %s2 = inlined_call_operand.vmem [shape: f32[4,64], index: 2, kind: input, shape index: {}]
  %s3 = inlined_call_operand.hbm [shape: f32[4,64,256], index: 3, kind: output, shape index: {}]
  %s4 = sld [smem:[#allocation0]]
  $region49: #{tpu_custom_call.1} parent=0
    _
  %s6 = ssub.s32 1, %s4
  %s7 = scalar_select 0, %s6, %s4
  $region1: #{tpu_custom_call.1} parent=0
    #allocation2 [shape = 'u8[262144]{0}', space=vmem, size = 0x40000, scoped, tag = 'input window, operand 0']
    #allocation3 [shape = 's32[2]{0}', space=sflag, size = 0x8, scoped, tag = 'scoped memory for tpu_custom_call.1']
    #allocation4 [shape = 's32[2]{0}', space=sflag, size = 0x8, scoped, tag = 'scoped memory for tpu_custom_call.1']
    #allocation5 [shape = 'u8[262144]{0}', space=vmem, size = 0x40000, scoped, tag = 'output window, operand 0']
    %8 = vsyncpa [#allocation3], 0
    %s9 = scalar_lea.sflag [#allocation3], 1
    %10 = vsyncpa %s9, 0
    %11 = vsyncpa [#allocation4], 0
    %s12 = scalar_lea.sflag [#allocation4], 1
    %13 = vsyncpa %s12, 0
    loop: start=0, step=1, limit=4
    $region2: #{tpu_custom_call.1} parent=1 // loop_pre_header
      _
    $region3: #{tpu_custom_call.1} parent=1 // loop_header
      %s15 = sphi 0, %s19
      %p16 = scmp.ge.s32.totalorder %s15, 4
      %s25 = sphi 0, %s27
      %s28 = sphi 0, %s25
      %s29 = sphi 0, %s28
      %s45 = sphi 0, %s29
      %s49 = sphi 0, %s49
      %s51 = sphi 0, %s49
      %s52 = sphi 0, %s51
      %s66 = sphi 0, %s52
      %s70 = sphi 0, %s70
      %s72 = sphi 0, %s70
      %s73 = sphi 0, %s72
      %s87 = sphi 0, %s73
      %s93 = sphi 0, %s95
      %s96 = sphi 0, %s93
      %s97 = sphi 0, %s96
      %s113 = sphi 0, %s97
    $region4: #{tpu_custom_call.1} parent=1 // loop_header_branch
      %18 = sbr.rel (%p16) target = $region8
    $region5: #{tpu_custom_call.1} parent=1 // loop_body
      %s20 = ssub.s32 %s15, 1
      %s21 = ssub.s32 %s15, 2
      %s22 = sadd.s32 %s15, 1
      %s23 = ssub.s32 %s15, %s22
      %p24 = scmp.eq.s32.totalorder %s23, 0
      %s26 = sadd.s32 %s25, 1
      %s27 = scalar_select %p24, %s25, %s26
      %p30 = pneg %p24
      %p31 = scmp.eq.s32.totalorder %s15, 1
      %p32 = por %p30, %p31
      %p33 = scmp.ne.s32.totalorder %s25, %s28
      %p34 = scmp.eq.s32.totalorder %s15, 0
      %p35 = por %p33, %p34
      %p36 = scmp.ne.s32.totalorder %s25, %s28
      %p37 = scmp.eq.s32.totalorder %s20, 1
      %p38 = por %p36, %p37
      %p39 = scmp.ne.s32.totalorder %s28, %s29
      %p40 = scmp.eq.s32.totalorder %s20, 0
      %p41 = por %p39, %p40
      %p42 = scmp.ne.s32.totalorder %s28, %s29
      %p43 = scmp.eq.s32.totalorder %s21, 1
      %p44 = por %p42, %p43
      %p46 = scmp.ne.s32.totalorder %s29, %s45
      %p47 = scmp.eq.s32.totalorder %s21, 0
      %p48 = por %p46, %p47
      %s50 = sadd.s32 %s49, 1
      %p53 = scmp.eq.s32.totalorder %s15, 1
      %p54 = scmp.ne.s32.totalorder %s49, %s51
      %p55 = scmp.eq.s32.totalorder %s15, 0
      %p56 = por %p54, %p55
      %p57 = scmp.ne.s32.totalorder %s49, %s51
      %p58 = scmp.eq.s32.totalorder %s20, 1
      %p59 = por %p57, %p58
      %p60 = scmp.ne.s32.totalorder %s51, %s52
      %p61 = scmp.eq.s32.totalorder %s20, 0
      %p62 = por %p60, %p61
      %p63 = scmp.ne.s32.totalorder %s51, %s52
      %p64 = scmp.eq.s32.totalorder %s21, 1
      %p65 = por %p63, %p64
      %p67 = scmp.ne.s32.totalorder %s52, %s66
      %p68 = scmp.eq.s32.totalorder %s21, 0
      %p69 = por %p67, %p68
      %s71 = sadd.s32 %s70, 1
      %p74 = scmp.eq.s32.totalorder %s15, 1
      %p75 = scmp.ne.s32.totalorder %s70, %s72
      %p76 = scmp.eq.s32.totalorder %s15, 0
      %p77 = por %p75, %p76
      %p78 = scmp.ne.s32.totalorder %s70, %s72
      %p79 = scmp.eq.s32.totalorder %s20, 1
      %p80 = por %p78, %p79
      %p81 = scmp.ne.s32.totalorder %s72, %s73
      %p82 = scmp.eq.s32.totalorder %s20, 0
      %p83 = por %p81, %p82
      %p84 = scmp.ne.s32.totalorder %s72, %s73
      %p85 = scmp.eq.s32.totalorder %s21, 1
      %p86 = por %p84, %p85
      %p88 = scmp.ne.s32.totalorder %s73, %s87
      %p89 = scmp.eq.s32.totalorder %s21, 0
      %p90 = por %p88, %p89
      %s91 = ssub.s32 %s15, %s22
      %p92 = scmp.eq.s32.totalorder %s91, 0
      %s94 = sadd.s32 %s93, 1
      %s95 = scalar_select %p92, %s93, %s94
      %p98 = pneg %p92
      %p99 = scmp.eq.s32.totalorder %s15, 1
      %p100 = por %p98, %p99
      %p101 = scmp.ne.s32.totalorder %s93, %s96
      %p102 = scmp.eq.s32.totalorder %s15, 0
      %p103 = por %p101, %p102
      %p104 = scmp.ne.s32.totalorder %s93, %s96
      %p105 = scmp.eq.s32.totalorder %s20, 1
      %p106 = por %p104, %p105
      %p107 = scmp.ne.s32.totalorder %s96, %s97
      %p108 = scmp.eq.s32.totalorder %s20, 0
      %p109 = por %p107, %p108
      %p110 = scmp.ne.s32.totalorder %s96, %s97
      %p111 = scmp.eq.s32.totalorder %s21, 1
      %p112 = por %p110, %p111
      %p114 = scmp.ne.s32.totalorder %s97, %s113
      %p115 = scmp.eq.s32.totalorder %s21, 0
      %p116 = por %p114, %p115
      %p117 = scmp.le.s32.totalorder 1, %s15
      %p118 = scmp.lt.s32.totalorder %s15, 3
      %p119 = pnand %p117, %p118
      %p120 = pneg %p119
      // Predicated region
      $region9: #{tpu_custom_call.1} parent=5 // pred_check
        _
      $region10: #{tpu_custom_call.1} parent=5 // pred_check_branch
        %122 = sbr.rel (%p119) target = $region12
      $region11: #{tpu_custom_call.1} parent=5 // pred_region
        %s123 = ssub.s32 %s15, 1
        // Predicated region
        $region13: #{tpu_custom_call.1} parent=11 // pred_check
          %p124 = pneg %p62
        $region14: #{tpu_custom_call.1} parent=11 // pred_check_branch
          %126 = sbr.rel (%p124) target = $region16
        $region15: #{tpu_custom_call.1} parent=11 // pred_region
          _
        $region16: #{tpu_custom_call.1} parent=11 // pred_fallthru
          _
        // Predicated region
        $region17: #{tpu_custom_call.1} parent=11 // pred_check
          %p127 = pneg %p83
        $region18: #{tpu_custom_call.1} parent=11 // pred_check_branch
          %129 = sbr.rel (%p127) target = $region20
        $region19: #{tpu_custom_call.1} parent=11 // pred_region
          _
        $region20: #{tpu_custom_call.1} parent=11 // pred_fallthru
          _
      $region12: #{tpu_custom_call.1} parent=5 // pred_fallthru
        _
      %p130 = scmp.lt.s32.totalorder %s15, 2
      // Predicated region
      $region21: #{tpu_custom_call.1} parent=5 // pred_check
        %p131 = pneg %p130
      $region22: #{tpu_custom_call.1} parent=5 // pred_check_branch
        %133 = sbr.rel (%p131) target = $region24
      $region23: #{tpu_custom_call.1} parent=5 // pred_region
        // Predicated region
        $region25: #{tpu_custom_call.1} parent=23 // pred_check
          %p134 = pneg %p35
        $region26: #{tpu_custom_call.1} parent=23 // pred_check_branch
          %136 = sbr.rel (%p134) target = $region28
        $region27: #{tpu_custom_call.1} parent=23 // pred_region
          %s137 = sand.u32 %s25, 1
          %s138 = scalar_lea.sflag [#allocation3], %s137
          %s139 = sand.u32 %s25, 1
          %s140 = smul.addr %s139, 256
          %s141 = scalar_lea.vmem [#allocation2], %s140
          %s142 = smul.u32 2, %s15
          %s144 = ssub.s32 4096, 4096
          %145 = vsyncadd %s138, %s144
          %s146 = smul.addr %s142, 16
          %s147 = smul.addr %s146, 128
          %s148 = scalar_lea.hbm %s0, %s147
          %s149 = sshll.u32 %s141, 4
          %s150 = int_to_ptr.vmem [resolvable:$true] %s149
          %155 = dma.hbm_to_vmem [thread:$0]  %s148, 4096, %s150, %s138, 256, 256, 16
        $region28: #{tpu_custom_call.1} parent=23 // pred_fallthru
          _
      $region24: #{tpu_custom_call.1} parent=5 // pred_fallthru
        _
      %p156 = scmp.le.s32.totalorder 1, %s15
      %p157 = scmp.lt.s32.totalorder %s15, 3
      %p158 = pnand %p156, %p157
      %p159 = pneg %p158
      // Predicated region
      $region29: #{tpu_custom_call.1} parent=5 // pred_check
        _
      $region30: #{tpu_custom_call.1} parent=5 // pred_check_branch
        %161 = sbr.rel (%p158) target = $region32
      $region31: #{tpu_custom_call.1} parent=5 // pred_region
        %s162 = ssub.s32 %s15, 1
        %s163 = sand.u32 %s28, 1
        %s164 = scalar_lea.sflag [#allocation3], %s163
        %s165 = sand.u32 %s28, 1
        %s166 = smul.addr %s165, 256
        %s167 = scalar_lea.vmem [#allocation2], %s166
        // Predicated region
        $region33: #{tpu_custom_call.1} parent=31 // pred_check
          %p168 = pneg %p41
        $region34: #{tpu_custom_call.1} parent=31 // pred_check_branch
          %170 = sbr.rel (%p168) target = $region36
        $region35: #{tpu_custom_call.1} parent=31 // pred_region
          %171 = dma.done %s164, 4096
        $region36: #{tpu_custom_call.1} parent=31 // pred_fallthru
          _
        %s172 = sand.u32 %s28, 1
        %s173 = scalar_lea.sflag [#allocation3], %s172
        %s174 = sand.u32 %s28, 1
        %s175 = smul.addr %s174, 256
        %s176 = scalar_lea.vmem [#allocation2], %s175
        %p177 = pneg %p41
        %p178 = pneg %p38
        %p179 = pneg %p62
        %p180 = pneg %p59
        %p181 = pneg %p83
        %p182 = pneg %p80
        %p183 = pneg %p109
        %p184 = pneg %p106
        %s185 = sand.u32 %s96, 1
        %s186 = scalar_lea.sflag [#allocation4], %s185
        %s187 = sand.u32 %s96, 1
        %s188 = smul.addr %s187, 256
        %s189 = scalar_lea.vmem [#allocation5], %s188
        %s190 = smul.u32 2, %s20
        %s191 = smul.u32 2, %s20
        %v192 = vld [vmem:[%s167] sm:$0xff]
        %v193 = vld [vmem:[%s167 + $0x8] sm:$0xff]
        %v194 = vld [vmem:[%s167 + $0x10] sm:$0xff]
        %v195 = vld [vmem:[%s167 + $0x18] sm:$0xff]
        %v196 = vld [vmem:[%s167 + $0x20] sm:$0xff]
        %v197 = vld [vmem:[%s167 + $0x28] sm:$0xff]
        %v198 = vld [vmem:[%s167 + $0x30] sm:$0xff]
        %v199 = vld [vmem:[%s167 + $0x38] sm:$0xff]
        %v200 = vld [vmem:[%s167 + $0x40] sm:$0xff]
        %v201 = vld [vmem:[%s167 + $0x48] sm:$0xff]
        %v202 = vld [vmem:[%s167 + $0x50] sm:$0xff]
        %v203 = vld [vmem:[%s167 + $0x58] sm:$0xff]
        %v204 = vld [vmem:[%s167 + $0x60] sm:$0xff]
        %v205 = vld [vmem:[%s167 + $0x68] sm:$0xff]
        %v206 = vld [vmem:[%s167 + $0x70] sm:$0xff]
        %v207 = vld [vmem:[%s167 + $0x78] sm:$0xff]
        %v208 = vld [vmem:[%s167 + $0x80] sm:$0xff]
        %v209 = vld [vmem:[%s167 + $0x88] sm:$0xff]
        %v210 = vld [vmem:[%s167 + $0x90] sm:$0xff]
        %v211 = vld [vmem:[%s167 + $0x98] sm:$0xff]
        %v212 = vld [vmem:[%s167 + $0xa0] sm:$0xff]
        %v213 = vld [vmem:[%s167 + $0xa8] sm:$0xff]
        %v214 = vld [vmem:[%s167 + $0xb0] sm:$0xff]
        %v215 = vld [vmem:[%s167 + $0xb8] sm:$0xff]
        %v216 = vld [vmem:[%s167 + $0xc0] sm:$0xff]
        %v217 = vld [vmem:[%s167 + $0xc8] sm:$0xff]
        %v218 = vld [vmem:[%s167 + $0xd0] sm:$0xff]
        %v219 = vld [vmem:[%s167 + $0xd8] sm:$0xff]
        %v220 = vld [vmem:[%s167 + $0xe0] sm:$0xff]
        %v221 = vld [vmem:[%s167 + $0xe8] sm:$0xff]
        %v222 = vld [vmem:[%s167 + $0xf0] sm:$0xff]
        %v223 = vld [vmem:[%s167 + $0xf8] sm:$0xff]
        %v224 = vadd.f32 %v192, %v193
        %225 = vadd.xlane.f32.xlu0 %v224
        %v226 = vpop.xlane.xlu0 %225
        %v227 = vadd.f32 %v194, %v195
        %228 = vadd.xlane.f32.xlu0 %v227
        %v229 = vpop.xlane.xlu0 %228
        %v230 = vadd.f32 %v196, %v197
        %231 = vadd.xlane.f32.xlu0 %v230
        %v232 = vpop.xlane.xlu0 %231
        %v233 = vadd.f32 %v198, %v199
        %234 = vadd.xlane.f32.xlu0 %v233
        %v235 = vpop.xlane.xlu0 %234
        %v236 = vadd.f32 %v200, %v201
        %237 = vadd.xlane.f32.xlu0 %v236
        %v238 = vpop.xlane.xlu0 %237
        %v239 = vadd.f32 %v202, %v203
        %240 = vadd.xlane.f32.xlu0 %v239
        %v241 = vpop.xlane.xlu0 %240
        %v242 = vadd.f32 %v204, %v205
        %243 = vadd.xlane.f32.xlu0 %v242
        %v244 = vpop.xlane.xlu0 %243
        %v245 = vadd.f32 %v206, %v207
        %246 = vadd.xlane.f32.xlu0 %v245
        %v247 = vpop.xlane.xlu0 %246
        %v248 = vadd.f32 %v208, %v209
        %249 = vadd.xlane.f32.xlu0 %v248
        %v250 = vpop.xlane.xlu0 %249
        %v251 = vadd.f32 %v210, %v211
        %252 = vadd.xlane.f32.xlu0 %v251
        %v253 = vpop.xlane.xlu0 %252
        %v254 = vadd.f32 %v212, %v213
        %255 = vadd.xlane.f32.xlu0 %v254
        %v256 = vpop.xlane.xlu0 %255
        %v257 = vadd.f32 %v214, %v215
        %258 = vadd.xlane.f32.xlu0 %v257
        %v259 = vpop.xlane.xlu0 %258
        %v260 = vadd.f32 %v216, %v217
        %261 = vadd.xlane.f32.xlu0 %v260
        %v262 = vpop.xlane.xlu0 %261
        %v263 = vadd.f32 %v218, %v219
        %264 = vadd.xlane.f32.xlu0 %v263
        %v265 = vpop.xlane.xlu0 %264
        %v266 = vadd.f32 %v220, %v221
        %267 = vadd.xlane.f32.xlu0 %v266
        %v268 = vpop.xlane.xlu0 %267
        %v269 = vadd.f32 %v222, %v223
        %270 = vadd.xlane.f32.xlu0 %v269
        %v271 = vpop.xlane.xlu0 %270
        %v272 = vmul.f32 %v226, 0.00390625
        %v273 = vmul.f32 %v229, 0.00390625
        %v274 = vmul.f32 %v232, 0.00390625
        %v275 = vmul.f32 %v235, 0.00390625
        %v276 = vmul.f32 %v238, 0.00390625
        %v277 = vmul.f32 %v241, 0.00390625
        %v278 = vmul.f32 %v244, 0.00390625
        %v279 = vmul.f32 %v247, 0.00390625
        %v280 = vmul.f32 %v250, 0.00390625
        %v281 = vmul.f32 %v253, 0.00390625
        %v282 = vmul.f32 %v256, 0.00390625
        %v283 = vmul.f32 %v259, 0.00390625
        %v284 = vmul.f32 %v262, 0.00390625
        %v285 = vmul.f32 %v265, 0.00390625
        %v286 = vmul.f32 %v268, 0.00390625
        %v287 = vmul.f32 %v271, 0.00390625
        %v288 = vld [vmem:[%s1] sm:$0xff]
        %v289 = vld [vmem:[%s1 + $0x8] sm:$0xff]
        %v290 = vld [vmem:[%s1 + $0x10] sm:$0xff]
        %v291 = vld [vmem:[%s1 + $0x18] sm:$0xff]
        %v292 = vld [vmem:[%s1 + $0x20] sm:$0xff]
        %v293 = vld [vmem:[%s1 + $0x28] sm:$0xff]
        %v294 = vld [vmem:[%s1 + $0x30] sm:$0xff]
        %v295 = vld [vmem:[%s1 + $0x38] sm:$0xff]
        %v312 = vlaneseq
        %v313 = vand.u32 %v312, 127
        %v314 = vlaneseq
        %v315 = vshrl.u32 %v314, 7
        %v316 = vsub.s32 %v313, %v315
        %v317 = vrot.slane %v272, %v316
        %v318 = vadd.s32 %v313, 4294967288
        %v319 = vlaneseq
        %v320 = vshrl.u32 %v319, 7
        %v321 = vsub.s32 %v318, %v320
        %v322 = vrot.slane %v273, %v321
        %vm323 = vcmask 130112
        %v324 = vsel %vm323, %v322, %v317
        %v325 = vadd.s32 %v313, 4294967280
        %v326 = vlaneseq
        %v327 = vshrl.u32 %v326, 7
        %v328 = vsub.s32 %v325, %v327
        %v329 = vrot.slane %v274, %v328
        %vm330 = vcmask 195712
        %v331 = vsel %vm330, %v329, %v324
        %v332 = vadd.s32 %v313, 4294967272
        %v333 = vlaneseq
        %v334 = vshrl.u32 %v333, 7
        %v335 = vsub.s32 %v332, %v334
        %v336 = vrot.slane %v275, %v335
        %vm337 = vcmask 261312
        %v338 = vsel %vm337, %v336, %v331
        %v339 = vadd.s32 %v313, 4294967264
        %v340 = vlaneseq
        %v341 = vshrl.u32 %v340, 7
        %v342 = vsub.s32 %v339, %v341
        %v343 = vrot.slane %v276, %v342
        %vm344 = vcmask 326912
        %v345 = vsel %vm344, %v343, %v338
        %v346 = vadd.s32 %v313, 4294967256
        %v347 = vlaneseq
        %v348 = vshrl.u32 %v347, 7
        %v349 = vsub.s32 %v346, %v348
        %v350 = vrot.slane %v277, %v349
        %vm351 = vcmask 392512
        %v352 = vsel %vm351, %v350, %v345
        %v353 = vadd.s32 %v313, 4294967248
        %v354 = vlaneseq
        %v355 = vshrl.u32 %v354, 7
        %v356 = vsub.s32 %v353, %v355
        %v357 = vrot.slane %v278, %v356
        %vm358 = vcmask 458112
        %v359 = vsel %vm358, %v357, %v352
        %v360 = vadd.s32 %v313, 4294967240
        %v361 = vlaneseq
        %v362 = vshrl.u32 %v361, 7
        %v363 = vsub.s32 %v360, %v362
        %v364 = vrot.slane %v279, %v363
        %vm365 = vcmask 523712
        %v366 = vsel %vm365, %v364, %v359
        %v367 = vlaneseq
        %v368 = vshrl.u32 %v367, 7
        %v369 = vsub.s32 %v313, %v368
        %v370 = vrot.slane %v280, %v369
        %v371 = vlaneseq
        %v372 = vshrl.u32 %v371, 7
        %v373 = vsub.s32 %v318, %v372
        %v374 = vrot.slane %v281, %v373
        %v375 = vsel %vm323, %v374, %v370
        %v376 = vlaneseq
        %v377 = vshrl.u32 %v376, 7
        %v378 = vsub.s32 %v325, %v377
        %v379 = vrot.slane %v282, %v378
        %v380 = vsel %vm330, %v379, %v375
        %v381 = vlaneseq
        %v382 = vshrl.u32 %v381, 7
        %v383 = vsub.s32 %v332, %v382
        %v384 = vrot.slane %v283, %v383
        %v385 = vsel %vm337, %v384, %v380
        %v386 = vlaneseq
        %v387 = vshrl.u32 %v386, 7
        %v388 = vsub.s32 %v339, %v387
        %v389 = vrot.slane %v284, %v388
        %v390 = vsel %vm344, %v389, %v385
        %v391 = vlaneseq
        %v392 = vshrl.u32 %v391, 7
        %v393 = vsub.s32 %v346, %v392
        %v394 = vrot.slane %v285, %v393
        %v395 = vsel %vm351, %v394, %v390
        %v396 = vlaneseq
        %v397 = vshrl.u32 %v396, 7
        %v398 = vsub.s32 %v353, %v397
        %v399 = vrot.slane %v286, %v398
        %v400 = vsel %vm358, %v399, %v395
        %v401 = vlaneseq
        %v402 = vshrl.u32 %v401, 7
        %v403 = vsub.s32 %v360, %v402
        %v404 = vrot.slane %v287, %v403
        %v405 = vsel %vm365, %v404, %v400
        %vm406 = vcmask 1041409
        %v407 = vsel %vm406, %v405, %v366
        %vm408 = vcmask 523264
        %v409 = vsel %vm408, %v407, 0
        %411 = vmatprep.subr.mxu0 0.0
        %412 = vmatpush1.msra.mxu0 %v288
        %413 = vmatprep.subr.mxu0 0.0
        %414 = vmatpush1.msra.mxu0 %v289
        %415 = vmatprep.subr.mxu0 0.0
        %416 = vmatpush1.msra.mxu0 %v290
        %417 = vmatprep.subr.mxu0 0.0
        %418 = vmatpush1.msra.mxu0 %v291
        %419 = vmatprep.subr.mxu0 0.0
        %420 = vmatpush1.msra.mxu0 %v292
        %421 = vmatprep.subr.mxu0 0.0
        %422 = vmatpush1.msra.mxu0 %v293
        %423 = vmatprep.subr.mxu0 0.0
        %424 = vmatpush1.msra.mxu0 %v294
        %425 = vmatprep.subr.mxu0 0.0
        %426 = vmatpush1.msra.mxu0 %v295
        %427 = vmatprep.subr.mxu0 0.0
        %428 = vmatpush1.msra.mxu0 0.0
        %429 = vmatprep.subr.mxu0 0.0
        %430 = vmatpush1.msra.mxu0 0.0
        %431 = vmatprep.subr.mxu0 0.0
        %432 = vmatpush1.msra.mxu0 0.0
        %433 = vmatprep.subr.mxu0 0.0
        %434 = vmatpush1.msra.mxu0 0.0
        %435 = vmatprep.subr.mxu0 0.0
        %436 = vmatpush1.msra.mxu0 0.0
        %437 = vmatprep.subr.mxu0 0.0
        %438 = vmatpush1.msra.mxu0 0.0
        %439 = vmatprep.subr.mxu0 0.0
        %440 = vmatpush1.msra.mxu0 0.0
        %441 = vmatprep.subr.mxu0 0.0
        %442 = vmatpush1.msra.mxu0 0.0
        %443 = vmatprep.subr.mxu0 0.0
        %444 = vmatpush1.msra.mxu0 0.0
        %445 = vmatprep.subr.mxu0 0.0
        %446 = vmatpush1.msra.mxu0 0.0
        %447 = vmatprep.subr.mxu0 0.0
        %448 = vmatpush1.msra.mxu0 0.0
        %449 = vmatprep.subr.mxu0 0.0
        %450 = vmatpush1.msra.mxu0 0.0
        %451 = vmatprep.subr.mxu0 0.0
        %452 = vmatpush1.msra.mxu0 0.0
        %453 = vmatprep.subr.mxu0 0.0
        %454 = vmatpush1.msra.mxu0 0.0
        %455 = vmatprep.subr.mxu0 0.0
        %456 = vmatpush1.msra.mxu0 0.0
        %457 = vmatprep.subr.mxu0 0.0
        %458 = vmatpush1.msra.mxu0 0.0
        %459 = vmatprep.subr.mxu0 0.0
        %460 = vmatpush1.msra.mxu0 0.0
        %461 = vmatprep.subr.mxu0 0.0
        %462 = vmatpush1.msra.mxu0 0.0
        %463 = vmatprep.subr.mxu0 0.0
        %464 = vmatpush1.msra.mxu0 0.0
        %465 = vmatprep.subr.mxu0 0.0
        %466 = vmatpush1.msra.mxu0 0.0
        %467 = vmatprep.subr.mxu0 0.0
        %468 = vmatpush1.msra.mxu0 0.0
        %469 = vmatprep.subr.mxu0 0.0
        %470 = vmatpush1.msra.mxu0 0.0
        %471 = vmatprep.subr.mxu0 0.0
        %472 = vmatpush1.msra.mxu0 0.0
        %473 = vmatprep.subr.mxu0 0.0
        %474 = vmatpush1.msra.mxu0 0.0
        %475 = vmatprep.mubr.f32.mxu0 0.0
        %476 = vmatmul.mubr.f32.gmra.mrb[0].mxu0 %v409
        %v477 = vpop.f32.mrb[0].mxu0
        %v478 = vadd.f32 0.0, %v477
        %v479 = vpop.f32.mrb[0].mxu0
        %480 = vdwg.mxu0
        %v481 = vmax.f32 %v478, 0.0
        %v482 = vld [vmem:[%s2] sm:$0xf]
        %vm483 = vcmask 31744
        %v485 = vsel %vm483, %v481, 0
        %vm487 = vcmask 1043456
        %v489 = vsel %vm487, %v482, 0
        %491 = vmatprep.subr.mxu0 0.0
        %492 = vmatpush1.msra.mxu0 %v489
        %493 = vmatprep.subr.mxu0 0.0
        %494 = vmatpush1.msra.mxu0 0.0
        %495 = vmatprep.subr.mxu0 0.0
        %496 = vmatpush1.msra.mxu0 0.0
        %497 = vmatprep.subr.mxu0 0.0
        %498 = vmatpush1.msra.mxu0 0.0
        %499 = vmatprep.subr.mxu0 0.0
        %500 = vmatpush1.msra.mxu0 0.0
        %501 = vmatprep.subr.mxu0 0.0
        %502 = vmatpush1.msra.mxu0 0.0
        %503 = vmatprep.subr.mxu0 0.0
        %504 = vmatpush1.msra.mxu0 0.0
        %505 = vmatprep.subr.mxu0 0.0
        %506 = vmatpush1.msra.mxu0 0.0
        %507 = vmatprep.subr.mxu0 0.0
        %508 = vmatpush1.msra.mxu0 0.0
        %509 = vmatprep.subr.mxu0 0.0
        %510 = vmatpush1.msra.mxu0 0.0
        %511 = vmatprep.subr.mxu0 0.0
        %512 = vmatpush1.msra.mxu0 0.0
        %513 = vmatprep.subr.mxu0 0.0
        %514 = vmatpush1.msra.mxu0 0.0
        %515 = vmatprep.subr.mxu0 0.0
        %516 = vmatpush1.msra.mxu0 0.0
        %517 = vmatprep.subr.mxu0 0.0
        %518 = vmatpush1.msra.mxu0 0.0
        %519 = vmatprep.subr.mxu0 0.0
        %520 = vmatpush1.msra.mxu0 0.0
        %521 = vmatprep.subr.mxu0 0.0
        %522 = vmatpush1.msra.mxu0 0.0
        %523 = vmatprep.subr.mxu0 0.0
        %524 = vmatpush1.msra.mxu0 0.0
        %525 = vmatprep.subr.mxu0 0.0
        %526 = vmatpush1.msra.mxu0 0.0
        %527 = vmatprep.subr.mxu0 0.0
        %528 = vmatpush1.msra.mxu0 0.0
        %529 = vmatprep.subr.mxu0 0.0
        %530 = vmatpush1.msra.mxu0 0.0
        %531 = vmatprep.subr.mxu0 0.0
        %532 = vmatpush1.msra.mxu0 0.0
        %533 = vmatprep.subr.mxu0 0.0
        %534 = vmatpush1.msra.mxu0 0.0
        %535 = vmatprep.subr.mxu0 0.0
        %536 = vmatpush1.msra.mxu0 0.0
        %537 = vmatprep.subr.mxu0 0.0
        %538 = vmatpush1.msra.mxu0 0.0
        %539 = vmatprep.subr.mxu0 0.0
        %540 = vmatpush1.msra.mxu0 0.0
        %541 = vmatprep.subr.mxu0 0.0
        %542 = vmatpush1.msra.mxu0 0.0
        %543 = vmatprep.subr.mxu0 0.0
        %544 = vmatpush1.msra.mxu0 0.0
        %545 = vmatprep.subr.mxu0 0.0
        %546 = vmatpush1.msra.mxu0 0.0
        %547 = vmatprep.subr.mxu0 0.0
        %548 = vmatpush1.msra.mxu0 0.0
        %549 = vmatprep.subr.mxu0 0.0
        %550 = vmatpush1.msra.mxu0 0.0
        %551 = vmatprep.subr.mxu0 0.0
        %552 = vmatpush1.msra.mxu0 0.0
        %553 = vmatprep.subr.mxu0 0.0
        %554 = vmatpush1.msra.mxu0 0.0
        %555 = vmatprep.mubr.f32.mxu0 0.0
        %556 = vmatmul.mubr.f32.gmra.mrb[0].mxu0 %v485
        %v557 = vpop.f32.mrb[0].mxu0
        %v558 = vadd.f32 0.0, %v557
        %v559 = vpop.f32.mrb[0].mxu0
        %560 = vdwg.mxu0
        %v561 = vxor.u32 %v558, 2147483648
        %v562 = vmul.f32 %v561, 1.442695
        %v563 = vpow.pop %v562
        %v564 = vadd.f32 %v563, 1.0
        %v565 = vrcp.pop %v564
        %v566 = vmul.f32 1.0, %v565
        %v567 = vlaneseq
        %v568 = vshrl.u32 %v567, 7
        %v569 = vsub.s32 0, %v568
        %v570 = vrot.slane %v566, %v569
        %572 = vbcast.lane.b32.xlu0 %v570, 256
        %v573 = vpop.permute.xlu0 %572
        %s575 = sor.u32 256, 8
        %576 = vbcast.lane.b32.xlu0 %v570, %s575
        %v577 = vpop.permute.xlu0 %576
        %s579 = sor.u32 256, 16
        %580 = vbcast.lane.b32.xlu0 %v570, %s579
        %v581 = vpop.permute.xlu0 %580
        %s583 = sor.u32 256, 24
        %584 = vbcast.lane.b32.xlu0 %v570, %s583
        %v585 = vpop.permute.xlu0 %584
        %s587 = sor.u32 256, 32
        %588 = vbcast.lane.b32.xlu0 %v570, %s587
        %v589 = vpop.permute.xlu0 %588
        %s591 = sor.u32 256, 40
        %592 = vbcast.lane.b32.xlu0 %v570, %s591
        %v593 = vpop.permute.xlu0 %592
        %s595 = sor.u32 256, 48
        %596 = vbcast.lane.b32.xlu0 %v570, %s595
        %v597 = vpop.permute.xlu0 %596
        %s599 = sor.u32 256, 56
        %600 = vbcast.lane.b32.xlu0 %v570, %s599
        %v601 = vpop.permute.xlu0 %600
        %v602 = vlaneseq
        %v603 = vshrl.u32 %v602, 7
        %v604 = vsub.s32 1, %v603
        %v605 = vrot.slane %v566, %v604
        %607 = vbcast.lane.b32.xlu0 %v605, 256
        %v608 = vpop.permute.xlu0 %607
        %s610 = sor.u32 256, 8
        %611 = vbcast.lane.b32.xlu0 %v605, %s610
        %v612 = vpop.permute.xlu0 %611
        %s614 = sor.u32 256, 16
        %615 = vbcast.lane.b32.xlu0 %v605, %s614
        %v616 = vpop.permute.xlu0 %615
        %s618 = sor.u32 256, 24
        %619 = vbcast.lane.b32.xlu0 %v605, %s618
        %v620 = vpop.permute.xlu0 %619
        %s622 = sor.u32 256, 32
        %623 = vbcast.lane.b32.xlu0 %v605, %s622
        %v624 = vpop.permute.xlu0 %623
        %s626 = sor.u32 256, 40
        %627 = vbcast.lane.b32.xlu0 %v605, %s626
        %v628 = vpop.permute.xlu0 %627
        %s630 = sor.u32 256, 48
        %631 = vbcast.lane.b32.xlu0 %v605, %s630
        %v632 = vpop.permute.xlu0 %631
        %s634 = sor.u32 256, 56
        %635 = vbcast.lane.b32.xlu0 %v605, %s634
        %v636 = vpop.permute.xlu0 %635
        %v637 = vmul.f32 %v192, %v573
        %v638 = vmul.f32 %v193, %v573
        %v639 = vmul.f32 %v194, %v577
        %v640 = vmul.f32 %v195, %v577
        %v641 = vmul.f32 %v196, %v581
        %v642 = vmul.f32 %v197, %v581
        %v643 = vmul.f32 %v198, %v585
        %v644 = vmul.f32 %v199, %v585
        %v645 = vmul.f32 %v200, %v589
        %v646 = vmul.f32 %v201, %v589
        %v647 = vmul.f32 %v202, %v593
        %v648 = vmul.f32 %v203, %v593
        %v649 = vmul.f32 %v204, %v597
        %v650 = vmul.f32 %v205, %v597
        %v651 = vmul.f32 %v206, %v601
        %v652 = vmul.f32 %v207, %v601
        %v653 = vmul.f32 %v208, %v608
        %v654 = vmul.f32 %v209, %v608
        %v655 = vmul.f32 %v210, %v612
        %v656 = vmul.f32 %v211, %v612
        %v657 = vmul.f32 %v212, %v616
        %v658 = vmul.f32 %v213, %v616
        %v659 = vmul.f32 %v214, %v620
        %v660 = vmul.f32 %v215, %v620
        %v661 = vmul.f32 %v216, %v624
        %v662 = vmul.f32 %v217, %v624
        %v663 = vmul.f32 %v218, %v628
        %v664 = vmul.f32 %v219, %v628
        %v665 = vmul.f32 %v220, %v632
        %v666 = vmul.f32 %v221, %v632
        %v667 = vmul.f32 %v222, %v636
        %v668 = vmul.f32 %v223, %v636
        %669 = vst [vmem:[%s189] sm:$0xff] %v637
        %670 = vst [vmem:[%s189 + $0x8] sm:$0xff] %v638
        %671 = vst [vmem:[%s189 + $0x10] sm:$0xff] %v639
        %672 = vst [vmem:[%s189 + $0x18] sm:$0xff] %v640
        %673 = vst [vmem:[%s189 + $0x20] sm:$0xff] %v641
        %674 = vst [vmem:[%s189 + $0x28] sm:$0xff] %v642
        %675 = vst [vmem:[%s189 + $0x30] sm:$0xff] %v643
        %676 = vst [vmem:[%s189 + $0x38] sm:$0xff] %v644
        %677 = vst [vmem:[%s189 + $0x40] sm:$0xff] %v645
        %678 = vst [vmem:[%s189 + $0x48] sm:$0xff] %v646
        %679 = vst [vmem:[%s189 + $0x50] sm:$0xff] %v647
        %680 = vst [vmem:[%s189 + $0x58] sm:$0xff] %v648
        %681 = vst [vmem:[%s189 + $0x60] sm:$0xff] %v649
        %682 = vst [vmem:[%s189 + $0x68] sm:$0xff] %v650
        %683 = vst [vmem:[%s189 + $0x70] sm:$0xff] %v651
        %684 = vst [vmem:[%s189 + $0x78] sm:$0xff] %v652
        %685 = vst [vmem:[%s189 + $0x80] sm:$0xff] %v653
        %686 = vst [vmem:[%s189 + $0x88] sm:$0xff] %v654
        %687 = vst [vmem:[%s189 + $0x90] sm:$0xff] %v655
        %688 = vst [vmem:[%s189 + $0x98] sm:$0xff] %v656
        %689 = vst [vmem:[%s189 + $0xa0] sm:$0xff] %v657
        %690 = vst [vmem:[%s189 + $0xa8] sm:$0xff] %v658
        %691 = vst [vmem:[%s189 + $0xb0] sm:$0xff] %v659
        %692 = vst [vmem:[%s189 + $0xb8] sm:$0xff] %v660
        %693 = vst [vmem:[%s189 + $0xc0] sm:$0xff] %v661
        %694 = vst [vmem:[%s189 + $0xc8] sm:$0xff] %v662
        %695 = vst [vmem:[%s189 + $0xd0] sm:$0xff] %v663
        %696 = vst [vmem:[%s189 + $0xd8] sm:$0xff] %v664
        %697 = vst [vmem:[%s189 + $0xe0] sm:$0xff] %v665
        %698 = vst [vmem:[%s189 + $0xe8] sm:$0xff] %v666
        %699 = vst [vmem:[%s189 + $0xf0] sm:$0xff] %v667
        %700 = vst [vmem:[%s189 + $0xf8] sm:$0xff] %v668
        %s701 = sand.u32 %s96, 1
        %s702 = scalar_lea.sflag [#allocation4], %s701
        %s703 = sand.u32 %s96, 1
        %s704 = smul.addr %s703, 256
        %s705 = scalar_lea.vmem [#allocation5], %s704
        // Predicated region
        $region37: #{tpu_custom_call.1} parent=31 // pred_check
          %p706 = pneg %p106
        $region38: #{tpu_custom_call.1} parent=31 // pred_check_branch
          %708 = sbr.rel (%p706) target = $region40
        $region39: #{tpu_custom_call.1} parent=31 // pred_region
          %s709 = smul.u32 2, %s20
          %s711 = ssub.s32 4096, 4096
          %712 = vsyncadd %s702, %s711
          %s713 = smul.addr %s709, 16
          %s714 = smul.addr %s713, 128
          %s715 = scalar_lea.hbm %s3, %s714
          %s716 = sshll.u32 %s705, 4
          %s717 = int_to_ptr.vmem [resolvable:$true] %s716
          %722 = dma.vmem_to_hbm [thread:$0]  %s717, 4096, %s715, %s702, 256, 256, 16
        $region40: #{tpu_custom_call.1} parent=31 // pred_fallthru
          _
      $region32: #{tpu_custom_call.1} parent=5 // pred_fallthru
        _
      %p723 = scmp.le.s32.totalorder 2, %s15
      // Predicated region
      $region41: #{tpu_custom_call.1} parent=5 // pred_check
        %p724 = pneg %p723
      $region42: #{tpu_custom_call.1} parent=5 // pred_check_branch
        %726 = sbr.rel (%p724) target = $region44
      $region43: #{tpu_custom_call.1} parent=5 // pred_region
        %s727 = ssub.s32 %s15, 2
        // Predicated region
        $region45: #{tpu_custom_call.1} parent=43 // pred_check
          %p728 = pneg %p112
        $region46: #{tpu_custom_call.1} parent=43 // pred_check_branch
          %730 = sbr.rel (%p728) target = $region48
        $region47: #{tpu_custom_call.1} parent=43 // pred_region
          %s731 = sand.u32 %s97, 1
          %s732 = scalar_lea.sflag [#allocation4], %s731
          %s733 = sand.u32 %s97, 1
          %s734 = smul.addr %s733, 256
          %s735 = scalar_lea.vmem [#allocation5], %s734
          %736 = dma.done %s732, 4096
        $region48: #{tpu_custom_call.1} parent=43 // pred_fallthru
          _
      $region44: #{tpu_custom_call.1} parent=5 // pred_fallthru
        _
    $region6: #{tpu_custom_call.1} parent=1 // loop_footer
      %s19 = sadd.s32 1, %s15
    $region7: #{tpu_custom_call.1} parent=1 // loop_footer_branch
      %14 = sbr.rel target = $region3
    $region8: #{tpu_custom_call.1} parent=1 // loop_exit
      _
    %737 = vsyncpa [#allocation3], 1
    %s738 = scalar_lea.sflag [#allocation3], 1
    %739 = vsyncpa %s738, 1
    %740 = vsyncpa [#allocation4], 1
    %s741 = scalar_lea.sflag [#allocation4], 1
    %742 = vsyncpa %s741, 1

</llo_original>
